<compile_context>
chip_gen: v7x
topology: tpu7x:2x2x1
jax: 0.10.0
libtpu: 0.0.40
codegen_flags: <defaults>
</compile_context>

<pallas_src>
import functools

import jax
import jax.numpy as jnp
from jax.experimental import pallas as pl
from jax.experimental.pallas import tpu as pltpu

LANES = 128  # TPU vreg lane width


def _round_up(x, m):
    return ((x + m - 1) // m) * m


def _basic_block_kernel(x_ref, w1_ref, b1_ref, w2_ref, b2_ref, o_ref, mid_ref, *, H):
    """One grid step == one batch element, lane-packed (row, W*C) layout.

    x_ref  : (1, Hp2, L) f32  image rows at [1, 1+H), zero halo rows elsewhere;
                              lane index = w*C + c (zero beyond W*C).
    w*_ref : (3*L, L)    bf16 BN-folded banded conv weights (dh-major; the 3 dw taps
                              are folded into the band structure of each (L, L) block).
    b*_ref : (1, L)      f32  BN-folded bias broadcast over the w positions.
    o_ref  : (1, H8, L)  f32  compact lane-dense output slab (real rows [0, H)).
    mid_ref: (Hp2, L)    bf16 scratch: conv1 output with zero dh-halo rows.
    """
    L = o_ref.shape[-1]
    H8 = o_ref.shape[1]
    Hp2 = x_ref.shape[1]

    def conv(read, w_ref):
        # im2col over the 3 dh taps only; the dw taps live in the banded weights,
        # so each 3x3 conv is ONE MXU matmul with K = 3*L.
        xcol = jnp.concatenate([read(0), read(1), read(2)], axis=-1)      # (H, 3L) bf16
        return jnp.dot(xcol, w_ref[...], preferred_element_type=jnp.float32)

    # ---- conv1 + bn1 (folded) + relu ----
    acc1 = conv(lambda d: x_ref[0, d:d + H, :].astype(jnp.bfloat16), w1_ref)
    out1 = jnp.maximum(acc1 + b1_ref[...], 0.0)

    # Stage conv1's output in a dh-zero-padded scratch for conv2. The halo rows are
    # re-zeroed every step (< 1 vreg of bf16 stores): a pid==0-guarded init would be
    # skipped on the second TensorCore under ("parallel",) megacore sharding.
    mid_ref[0:1, :] = jnp.zeros((1, L), jnp.bfloat16)
    mid_ref[1 + H:Hp2, :] = jnp.zeros((Hp2 - 1 - H, L), jnp.bfloat16)
    mid_ref[1:1 + H, :] = out1.astype(jnp.bfloat16)

    # ---- conv2 + bn2 (folded) + f32 residual + relu ----
    acc2 = conv(lambda d: mid_ref[d:d + H, :], w2_ref)
    out = jnp.maximum(acc2 + b2_ref[...] + x_ref[0, 1:1 + H, :], 0.0)
    o_ref[0, 0:H, :] = out
    if H8 > H:  # static: keep the whole output slab clean (no garbage rows)
        o_ref[0, H:H8, :] = jnp.zeros((H8 - H, L), jnp.float32)


def basic_block_pallas(x_nhwc, w1, g1, be1, m1, v1, w2, g2, be2, m2, v2, eps=1e-5):
    """BasicBlock forward (stride=1, groups=1, no downsample), eval-mode BN.

    x_nhwc : (N, H, W, C) f32   w* : (3, 3, C, C) HWIO   bn params : (C,)
    """
    N, H, W, C = x_nhwc.shape
    WC = W * C
    L = _round_up(WC, LANES)        # lane-dense packed row width
    Hp2 = _round_up(H + 2, 8)       # halo-padded row count (1 zero row above, >=1 below)
    H8 = _round_up(H, 8)            # output slab rows

    # ---- fold eval-mode BatchNorm into the convs (scale -> weights, bias stays) ----
    inv1 = g1 / jnp.sqrt(v1 + eps)
    inv2 = g2 / jnp.sqrt(v2 + eps)
    w1f = w1 * inv1[None, None, None, :]
    w2f = w2 * inv2[None, None, None, :]
    b1v = be1 - m1 * inv1
    b2v = be2 - m2 * inv2

    # ---- banded (block tri-diagonal) weight matrices: dw taps folded into the band ----
    wi = jnp.arange(W)
    dw = wi[:, None] - wi[None, :] + 1             # (W_in, W_out)
    valid = (dw >= 0) & (dw <= 2)
    dwc = jnp.clip(dw, 0, 2)

    def banded(wf):                                # wf: (3, 3, C, C) HWIO, BN-folded
        bands = []
        for dh in range(3):
            T = wf[dh][dwc]                        # (W_in, W_out, C_in, C_out)
            T = jnp.where(valid[:, :, None, None], T, 0.0)
            T = jnp.transpose(T, (0, 2, 1, 3)).reshape(WC, WC)
            bands.append(jnp.zeros((L, L), jnp.float32).at[:WC, :WC].set(T))
        return jnp.concatenate(bands, axis=0).astype(jnp.bfloat16)   # (3L, L)

    w1b = banded(w1f)
    w2b = banded(w2f)

    def bias_row(bv):
        return jnp.zeros((1, L), jnp.float32).at[0, :WC].set(jnp.tile(bv, W))

    b1p = bias_row(b1v)
    b2p = bias_row(b2v)

    # ---- lane-packed, halo-padded f32 input (residual path stays exact f32) ----
    xpk = jnp.zeros((N, Hp2, L), jnp.float32).at[:, 1:1 + H, :WC].set(
        x_nhwc.reshape(N, H, WC))

    kernel = functools.partial(_basic_block_kernel, H=H)

    out_pk = pl.pallas_call(
        kernel,
        out_shape=jax.ShapeDtypeStruct((N, H8, L), jnp.float32),
        grid_spec=pltpu.PrefetchScalarGridSpec(
            num_scalar_prefetch=0,
            grid=(N,),
            in_specs=[
                pl.BlockSpec((1, Hp2, L), lambda n: (n, 0, 0)),
                pl.BlockSpec((3 * L, L), lambda n: (0, 0)),
                pl.BlockSpec((1, L), lambda n: (0, 0)),
                pl.BlockSpec((3 * L, L), lambda n: (0, 0)),
                pl.BlockSpec((1, L), lambda n: (0, 0)),
            ],
            out_specs=pl.BlockSpec((1, H8, L), lambda n: (n, 0, 0)),
            scratch_shapes=[pltpu.VMEM((Hp2, L), jnp.bfloat16)],
        ),
        compiler_params=pltpu.CompilerParams(
            dimension_semantics=("parallel",)),
    )(xpk, w1b, b1p, w2b, b2p)

    # Compact lane-dense slab -> (N, H, W, C): cheap slice + reshape.
    return out_pk[:, :H, :WC].reshape(N, H, W, C)


def basic_block_ref(x_nhwc, w1, g1, be1, m1, v1, w2, g2, be2, m2, v2, eps=1e-5):
    """Pure-JAX f32 reference (NHWC / HWIO convs, eval-mode BN)."""
    dn = ("NHWC", "HWIO", "NHWC")
    conv = functools.partial(jax.lax.conv_general_dilated,
                             window_strides=(1, 1),
                             padding=((1, 1), (1, 1)),
                             dimension_numbers=dn)
    bn = lambda y, g, b, m, v: (y - m) / jnp.sqrt(v + eps) * g + b
    out = jax.nn.relu(bn(conv(x_nhwc, w1), g1, be1, m1, v1))
    out = bn(conv(out, w2), g2, be2, m2, v2)
    return jax.nn.relu(out + x_nhwc)


if __name__ == "__main__":
    # Small shapes consistent with BasicBlock(inplanes=planes=8, stride=1, downsample=None).
    N, C, H, W = 2, 8, 16, 16
    key = jax.random.PRNGKey(0)
    kx, kw1, kw2, kg1, kb1, km1, kv1, kg2, kb2, km2, kv2 = jax.random.split(key, 11)

    # PyTorch-style NCHW input -> kernel's NHWC layout.
    x_nchw = jax.random.normal(kx, (N, C, H, W), jnp.float32)
    x_nhwc = jnp.transpose(x_nchw, (0, 2, 3, 1))

    # Deterministic synthetic parameters (HWIO conv weights, per-channel BN params).
    w1 = 0.1 * jax.random.normal(kw1, (3, 3, C, C), jnp.float32)
    w2 = 0.1 * jax.random.normal(kw2, (3, 3, C, C), jnp.float32)
    g1 = 1.0 + 0.1 * jax.random.normal(kg1, (C,), jnp.float32)
    be1 = 0.1 * jax.random.normal(kb1, (C,), jnp.float32)
    m1 = 0.1 * jax.random.normal(km1, (C,), jnp.float32)
    v1 = jnp.abs(jax.random.normal(kv1, (C,), jnp.float32)) + 0.5
    g2 = 1.0 + 0.1 * jax.random.normal(kg2, (C,), jnp.float32)
    be2 = 0.1 * jax.random.normal(kb2, (C,), jnp.float32)
    m2 = 0.1 * jax.random.normal(km2, (C,), jnp.float32)
    v2 = jnp.abs(jax.random.normal(kv2, (C,), jnp.float32)) + 0.5

    out = basic_block_pallas(x_nhwc, w1, g1, be1, m1, v1, w2, g2, be2, m2, v2)
    out = jax.block_until_ready(out)

    ref = basic_block_ref(x_nhwc, w1, g1, be1, m1, v1, w2, g2, be2, m2, v2)
    assert out.shape == (N, H, W, C)
    # bf16 MXU operands (f32 accumulation, exact f32 residual) vs. f32 reference.
    max_err = float(jnp.max(jnp.abs(out - ref)))
    assert max_err < 5e-2, f"mismatch vs. pure-JAX reference (max abs err {max_err})"

    print("KERNEL_OK")
</pallas_src>

<mosaic_0001>
module attributes {stable_mosaic.version = 11 : i64} {
  func.func @_basic_block_kernel(%arg0: i32, %arg1: memref<1x24x128xf32, #tpu.memory_space<vmem>>, %arg2: memref<384x128xbf16, #tpu.memory_space<vmem>>, %arg3: memref<1x128xf32, #tpu.memory_space<vmem>>, %arg4: memref<384x128xbf16, #tpu.memory_space<vmem>>, %arg5: memref<1x128xf32, #tpu.memory_space<vmem>>, %arg6: memref<1x16x128xf32, #tpu.memory_space<vmem>>, %arg7: memref<24x128xbf16, #tpu.memory_space<vmem>>) attributes {dimension_semantics = [#tpu.dimension_semantics<parallel>], iteration_bounds = array<i64: 2>, scalar_prefetch = 0 : i64, scratch_operands = 1 : i64, tpu.core_type = #tpu.core_type<tc>, window_params = [{transform_indices = @transform_0, window_bounds = array<i64: 1, 24, 128>}, {pipeline_mode = #tpu.pipeline_mode<synchronous>, transform_indices = @transform_1, window_bounds = array<i64: 384, 128>}, {pipeline_mode = #tpu.pipeline_mode<synchronous>, transform_indices = @transform_2, window_bounds = array<i64: 1, 128>}, {pipeline_mode = #tpu.pipeline_mode<synchronous>, transform_indices = @transform_3, window_bounds = array<i64: 384, 128>}, {pipeline_mode = #tpu.pipeline_mode<synchronous>, transform_indices = @transform_4, window_bounds = array<i64: 1, 128>}, {transform_indices = @transform_5, window_bounds = array<i64: 1, 16, 128>}]} {
    %c0 = arith.constant 0 : index
    %c0_0 = arith.constant 0 : index
    %c0_1 = arith.constant 0 : index
    %0 = vector.load %arg1[%c0, %c0_0, %c0_1] : memref<1x24x128xf32, #tpu.memory_space<vmem>>, vector<1x16x128xf32>
    %1 = vector.shape_cast %0 : vector<1x16x128xf32> to vector<16x128xf32>
    %2 = arith.truncf %1 : vector<16x128xf32> to vector<16x128xbf16>
    %c0_2 = arith.constant 0 : index
    %c1 = arith.constant 1 : index
    %c0_3 = arith.constant 0 : index
    %3 = vector.load %arg1[%c0_2, %c1, %c0_3] : memref<1x24x128xf32, #tpu.memory_space<vmem>>, vector<1x16x128xf32>
    %4 = vector.shape_cast %3 : vector<1x16x128xf32> to vector<16x128xf32>
    %5 = arith.truncf %4 : vector<16x128xf32> to vector<16x128xbf16>
    %c0_4 = arith.constant 0 : index
    %c2 = arith.constant 2 : index
    %c0_5 = arith.constant 0 : index
    %6 = vector.load %arg1[%c0_4, %c2, %c0_5] : memref<1x24x128xf32, #tpu.memory_space<vmem>>, vector<1x16x128xf32>
    %7 = vector.shape_cast %6 : vector<1x16x128xf32> to vector<16x128xf32>
    %8 = arith.truncf %7 : vector<16x128xf32> to vector<16x128xbf16>
    %9 = tpu.concatenate %2, %5, %8 in 1 : vector<16x128xbf16>, vector<16x128xbf16>, vector<16x128xbf16> -> vector<16x384xbf16>
    %c0_6 = arith.constant 0 : index
    %c0_7 = arith.constant 0 : index
    %10 = vector.load %arg2[%c0_6, %c0_7] : memref<384x128xbf16, #tpu.memory_space<vmem>>, vector<384x128xbf16>
    %cst = arith.constant dense<0.000000e+00> : vector<16x128xf32>
    %11 = tpu.matmul %9, %10, %cst {dimension_numbers = #tpu.dot_dimension_numbers<[1], [0], [0], [1], [0, 0, 1, 1], [], []>} : vector<16x384xbf16>, vector<384x128xbf16>, vector<16x128xf32> -> vector<16x128xf32>
    %c0_8 = arith.constant 0 : index
    %c0_9 = arith.constant 0 : index
    %12 = vector.load %arg3[%c0_8, %c0_9] : memref<1x128xf32, #tpu.memory_space<vmem>>, vector<1x128xf32>
    %13 = vector.broadcast %12 : vector<1x128xf32> to vector<16x128xf32>
    %14 = arith.addf %11, %13 : vector<16x128xf32>
    %cst_10 = arith.constant 0.000000e+00 : f32
    %15 = vector.broadcast %cst_10 : f32 to vector<16x128xf32>
    %16 = arith.maximumf %14, %15 : vector<16x128xf32>
    %cst_11 = arith.constant 0.000000e+00 : bf16
    %17 = vector.broadcast %cst_11 : bf16 to vector<1x128xbf16>
    %c0_12 = arith.constant 0 : index
    %c0_13 = arith.constant 0 : index
    %18 = vector.load %arg7[%c0_12, %c0_13] : memref<24x128xbf16, #tpu.memory_space<vmem>>, vector<1x128xbf16>
    tpu.vector_store %arg7[%c0_12, %c0_13], %17 {strides = array<i32>} : memref<24x128xbf16, #tpu.memory_space<vmem>>, vector<1x128xbf16>,
    %cst_14 = arith.constant 0.000000e+00 : bf16
    %19 = vector.broadcast %cst_14 : bf16 to vector<7x128xbf16>
    %c17 = arith.constant 17 : index
    %c0_15 = arith.constant 0 : index
    %20 = vector.load %arg7[%c17, %c0_15] : memref<24x128xbf16, #tpu.memory_space<vmem>>, vector<7x128xbf16>
    tpu.vector_store %arg7[%c17, %c0_15], %19 {strides = array<i32>} : memref<24x128xbf16, #tpu.memory_space<vmem>>, vector<7x128xbf16>,
    %21 = arith.truncf %16 : vector<16x128xf32> to vector<16x128xbf16>
    %c1_16 = arith.constant 1 : index
    %c0_17 = arith.constant 0 : index
    %22 = vector.load %arg7[%c1_16, %c0_17] : memref<24x128xbf16, #tpu.memory_space<vmem>>, vector<16x128xbf16>
    tpu.vector_store %arg7[%c1_16, %c0_17], %21 {strides = array<i32>} : memref<24x128xbf16, #tpu.memory_space<vmem>>, vector<16x128xbf16>,
    %c0_18 = arith.constant 0 : index
    %c0_19 = arith.constant 0 : index
    %23 = vector.load %arg7[%c0_18, %c0_19] : memref<24x128xbf16, #tpu.memory_space<vmem>>, vector<16x128xbf16>
    %c1_20 = arith.constant 1 : index
    %c0_21 = arith.constant 0 : index
    %24 = vector.load %arg7[%c1_20, %c0_21] : memref<24x128xbf16, #tpu.memory_space<vmem>>, vector<16x128xbf16>
    %c2_22 = arith.constant 2 : index
    %c0_23 = arith.constant 0 : index
    %25 = vector.load %arg7[%c2_22, %c0_23] : memref<24x128xbf16, #tpu.memory_space<vmem>>, vector<16x128xbf16>
    %26 = tpu.concatenate %23, %24, %25 in 1 : vector<16x128xbf16>, vector<16x128xbf16>, vector<16x128xbf16> -> vector<16x384xbf16>
    %c0_24 = arith.constant 0 : index
    %c0_25 = arith.constant 0 : index
    %27 = vector.load %arg4[%c0_24, %c0_25] : memref<384x128xbf16, #tpu.memory_space<vmem>>, vector<384x128xbf16>
    %cst_26 = arith.constant dense<0.000000e+00> : vector<16x128xf32>
    %28 = tpu.matmul %26, %27, %cst_26 {dimension_numbers = #tpu.dot_dimension_numbers<[1], [0], [0], [1], [0, 0, 1, 1], [], []>} : vector<16x384xbf16>, vector<384x128xbf16>, vector<16x128xf32> -> vector<16x128xf32>
    %c0_27 = arith.constant 0 : index
    %c0_28 = arith.constant 0 : index
    %29 = vector.load %arg5[%c0_27, %c0_28] : memref<1x128xf32, #tpu.memory_space<vmem>>, vector<1x128xf32>
    %30 = vector.broadcast %29 : vector<1x128xf32> to vector<16x128xf32>
    %31 = arith.addf %28, %30 : vector<16x128xf32>
    %c0_29 = arith.constant 0 : index
    %c1_30 = arith.constant 1 : index
    %c0_31 = arith.constant 0 : index
    %32 = vector.load %arg1[%c0_29, %c1_30, %c0_31] : memref<1x24x128xf32, #tpu.memory_space<vmem>>, vector<1x16x128xf32>
    %33 = vector.shape_cast %32 : vector<1x16x128xf32> to vector<16x128xf32>
    %34 = arith.addf %31, %33 : vector<16x128xf32>
    %cst_32 = arith.constant 0.000000e+00 : f32
    %35 = vector.broadcast %cst_32 : f32 to vector<16x128xf32>
    %36 = arith.maximumf %34, %35 : vector<16x128xf32>
    %c0_33 = arith.constant 0 : index
    %c0_34 = arith.constant 0 : index
    %c0_35 = arith.constant 0 : index
    %37 = vector.load %arg6[%c0_33, %c0_34, %c0_35] : memref<1x16x128xf32, #tpu.memory_space<vmem>>, vector<1x16x128xf32>
    %38 = vector.shape_cast %37 : vector<1x16x128xf32> to vector<16x128xf32>
    %39 = vector.shape_cast %36 : vector<16x128xf32> to vector<1x16x128xf32>
    tpu.vector_store %arg6[%c0_33, %c0_34, %c0_35], %39 {strides = array<i32>} : memref<1x16x128xf32, #tpu.memory_space<vmem>>, vector<1x16x128xf32>,
    return
  }
  func.func @transform_0(%arg0: i32) -> (i32, i32, i32) {
    %c0_i32 = arith.constant 0 : i32
    %c0_i32_0 = arith.constant 0 : i32
    %c0_i32_1 = arith.constant 0 : i32
    return %arg0, %c0_i32, %c0_i32_0 : i32, i32, i32
  }
  func.func @transform_1(%arg0: i32) -> (i32, i32) {
    %c0_i32 = arith.constant 0 : i32
    %c0_i32_0 = arith.constant 0 : i32
    %c0_i32_1 = arith.constant 0 : i32
    return %c0_i32, %c0_i32_0 : i32, i32
  }
  func.func @transform_2(%arg0: i32) -> (i32, i32) {
    %c0_i32 = arith.constant 0 : i32
    %c0_i32_0 = arith.constant 0 : i32
    %c0_i32_1 = arith.constant 0 : i32
    return %c0_i32, %c0_i32_0 : i32, i32
  }
  func.func @transform_3(%arg0: i32) -> (i32, i32) {
    %c0_i32 = arith.constant 0 : i32
    %c0_i32_0 = arith.constant 0 : i32
    %c0_i32_1 = arith.constant 0 : i32
    return %c0_i32, %c0_i32_0 : i32, i32
  }
  func.func @transform_4(%arg0: i32) -> (i32, i32) {
    %c0_i32 = arith.constant 0 : i32
    %c0_i32_0 = arith.constant 0 : i32
    %c0_i32_1 = arith.constant 0 : i32
    return %c0_i32, %c0_i32_0 : i32, i32
  }
  func.func @transform_5(%arg0: i32) -> (i32, i32, i32) {
    %c0_i32 = arith.constant 0 : i32
    %c0_i32_0 = arith.constant 0 : i32
    %c0_i32_1 = arith.constant 0 : i32
    return %arg0, %c0_i32, %c0_i32_0 : i32, i32, i32
  }
}

</mosaic_0001>

<llo_original>
// kernel: tpu_custom_call.1
$region0: #{tpu_custom_call.1}
  #allocation0 [shape = 'u32[]', space=smem, size = 0x4, offset = 0x4, fixed_abs, tag = 'smem constant byte address 0x4 - core index']
  #allocation1 [shape = 'u32[144,128]{1,0:T(1,128)}', space=vmem, size = 0x12000, scoped, tag = 'internal scratch']
  #allocation2 [shape = 'bf16[24,128]{1,0:T(8,128)(2,1)}', space=vmem, size = 0x1800, scoped, tag = 'scratch operand']
  %s0 = inlined_call_operand.hbm [shape: f32[2,24,128], index: 0, kind: input, shape index: {}]
  %s1 = inlined_call_operand.hbm [shape: bf16[384,128], index: 1, kind: input, shape index: {}]
  %s2 = inlined_call_operand.vmem [shape: f32[1,128], index: 2, kind: input, shape index: {}]
  %s3 = inlined_call_operand.hbm [shape: bf16[384,128], index: 3, kind: input, shape index: {}]
  %s4 = inlined_call_operand.vmem [shape: f32[1,128], index: 4, kind: input, shape index: {}]
  %s5 = inlined_call_operand.hbm [shape: f32[2,16,128], index: 5, kind: output, shape index: {}]
  %s6 = sld [smem:[#allocation0]]
  $region65: #{tpu_custom_call.1} parent=0
    _
  %s8 = ssub.s32 1, %s6
  %s9 = scalar_select 0, %s8, %s6
  $region1: #{tpu_custom_call.1} parent=0
    #allocation3 [shape = 'u8[24576]{0}', space=vmem, size = 0x6000, scoped, tag = 'input window, operand 0']
    #allocation4 [shape = 's32[2]{0}', space=sflag, size = 0x8, scoped, tag = 'scoped memory for tpu_custom_call.1']
    #allocation5 [shape = 's32[2]{0}', space=sflag, size = 0x8, scoped, tag = 'scoped memory for tpu_custom_call.1']
    #allocation6 [shape = 'u8[98304]{0}', space=vmem, size = 0x18000, scoped, tag = 'input window, operand 1, single buffered']
    #allocation7 [shape = 's32[1]{0}', space=sflag, size = 0x4, scoped, tag = 'scoped memory for tpu_custom_call.1']
    #allocation8 [shape = 'u8[98304]{0}', space=vmem, size = 0x18000, scoped, tag = 'input window, operand 3, single buffered']
    #allocation9 [shape = 'u8[16384]{0}', space=vmem, size = 0x4000, scoped, tag = 'output window, operand 0']
    %10 = vsyncpa [#allocation4], 0
    %s11 = scalar_lea.sflag [#allocation4], 1
    %12 = vsyncpa %s11, 0
    %13 = vsyncpa [#allocation7], 0
    %14 = vsyncpa [#allocation5], 0
    %s15 = scalar_lea.sflag [#allocation5], 1
    %16 = vsyncpa %s15, 0
    loop: start=0, step=1, limit=4
    $region2: #{tpu_custom_call.1} parent=1 // loop_pre_header
      _
    $region3: #{tpu_custom_call.1} parent=1 // loop_header
      %s18 = sphi 0, %s22
      %p19 = scmp.ge.s32.totalorder %s18, 4
      %s28 = sphi 0, %s30
      %s31 = sphi 0, %s28
      %s32 = sphi 0, %s31
      %s48 = sphi 0, %s32
      %s52 = sphi 0, %s52
      %s54 = sphi 0, %s52
      %s55 = sphi 0, %s54
      %s69 = sphi 0, %s55
      %s73 = sphi 0, %s73
      %s75 = sphi 0, %s73
      %s76 = sphi 0, %s75
      %s90 = sphi 0, %s76
      %s94 = sphi 0, %s94
      %s96 = sphi 0, %s94
      %s97 = sphi 0, %s96
      %s111 = sphi 0, %s97
      %s115 = sphi 0, %s115
      %s117 = sphi 0, %s115
      %s118 = sphi 0, %s117
      %s132 = sphi 0, %s118
      %s138 = sphi 0, %s140
      %s141 = sphi 0, %s138
      %s142 = sphi 0, %s141
      %s158 = sphi 0, %s142
    $region4: #{tpu_custom_call.1} parent=1 // loop_header_branch
      %21 = sbr.rel (%p19) target = $region8
    $region5: #{tpu_custom_call.1} parent=1 // loop_body
      %s23 = ssub.s32 %s18, 1
      %s24 = ssub.s32 %s18, 2
      %s25 = sadd.s32 %s18, 1
      %s26 = ssub.s32 %s18, %s25
      %p27 = scmp.eq.s32.totalorder %s26, 0
      %s29 = sadd.s32 %s28, 1
      %s30 = scalar_select %p27, %s28, %s29
      %p33 = pneg %p27
      %p34 = scmp.eq.s32.totalorder %s18, 1
      %p35 = por %p33, %p34
      %p36 = scmp.ne.s32.totalorder %s28, %s31
      %p37 = scmp.eq.s32.totalorder %s18, 0
      %p38 = por %p36, %p37
      %p39 = scmp.ne.s32.totalorder %s28, %s31
      %p40 = scmp.eq.s32.totalorder %s23, 1
      %p41 = por %p39, %p40
      %p42 = scmp.ne.s32.totalorder %s31, %s32
      %p43 = scmp.eq.s32.totalorder %s23, 0
      %p44 = por %p42, %p43
      %p45 = scmp.ne.s32.totalorder %s31, %s32
      %p46 = scmp.eq.s32.totalorder %s24, 1
      %p47 = por %p45, %p46
      %p49 = scmp.ne.s32.totalorder %s32, %s48
      %p50 = scmp.eq.s32.totalorder %s24, 0
      %p51 = por %p49, %p50
      %s53 = sadd.s32 %s52, 1
      %p56 = scmp.eq.s32.totalorder %s18, 1
      %p57 = scmp.ne.s32.totalorder %s52, %s54
      %p58 = scmp.eq.s32.totalorder %s18, 0
      %p59 = por %p57, %p58
      %p60 = scmp.ne.s32.totalorder %s52, %s54
      %p61 = scmp.eq.s32.totalorder %s23, 1
      %p62 = por %p60, %p61
      %p63 = scmp.ne.s32.totalorder %s54, %s55
      %p64 = scmp.eq.s32.totalorder %s23, 0
      %p65 = por %p63, %p64
      %p66 = scmp.ne.s32.totalorder %s54, %s55
      %p67 = scmp.eq.s32.totalorder %s24, 1
      %p68 = por %p66, %p67
      %p70 = scmp.ne.s32.totalorder %s55, %s69
      %p71 = scmp.eq.s32.totalorder %s24, 0
      %p72 = por %p70, %p71
      %s74 = sadd.s32 %s73, 1
      %p77 = scmp.eq.s32.totalorder %s18, 1
      %p78 = scmp.ne.s32.totalorder %s73, %s75
      %p79 = scmp.eq.s32.totalorder %s18, 0
      %p80 = por %p78, %p79
      %p81 = scmp.ne.s32.totalorder %s73, %s75
      %p82 = scmp.eq.s32.totalorder %s23, 1
      %p83 = por %p81, %p82
      %p84 = scmp.ne.s32.totalorder %s75, %s76
      %p85 = scmp.eq.s32.totalorder %s23, 0
      %p86 = por %p84, %p85
      %p87 = scmp.ne.s32.totalorder %s75, %s76
      %p88 = scmp.eq.s32.totalorder %s24, 1
      %p89 = por %p87, %p88
      %p91 = scmp.ne.s32.totalorder %s76, %s90
      %p92 = scmp.eq.s32.totalorder %s24, 0
      %p93 = por %p91, %p92
      %s95 = sadd.s32 %s94, 1
      %p98 = scmp.eq.s32.totalorder %s18, 1
      %p99 = scmp.ne.s32.totalorder %s94, %s96
      %p100 = scmp.eq.s32.totalorder %s18, 0
      %p101 = por %p99, %p100
      %p102 = scmp.ne.s32.totalorder %s94, %s96
      %p103 = scmp.eq.s32.totalorder %s23, 1
      %p104 = por %p102, %p103
      %p105 = scmp.ne.s32.totalorder %s96, %s97
      %p106 = scmp.eq.s32.totalorder %s23, 0
      %p107 = por %p105, %p106
      %p108 = scmp.ne.s32.totalorder %s96, %s97
      %p109 = scmp.eq.s32.totalorder %s24, 1
      %p110 = por %p108, %p109
      %p112 = scmp.ne.s32.totalorder %s97, %s111
      %p113 = scmp.eq.s32.totalorder %s24, 0
      %p114 = por %p112, %p113
      %s116 = sadd.s32 %s115, 1
      %p119 = scmp.eq.s32.totalorder %s18, 1
      %p120 = scmp.ne.s32.totalorder %s115, %s117
      %p121 = scmp.eq.s32.totalorder %s18, 0
      %p122 = por %p120, %p121
      %p123 = scmp.ne.s32.totalorder %s115, %s117
      %p124 = scmp.eq.s32.totalorder %s23, 1
      %p125 = por %p123, %p124
      %p126 = scmp.ne.s32.totalorder %s117, %s118
      %p127 = scmp.eq.s32.totalorder %s23, 0
      %p128 = por %p126, %p127
      %p129 = scmp.ne.s32.totalorder %s117, %s118
      %p130 = scmp.eq.s32.totalorder %s24, 1
      %p131 = por %p129, %p130
      %p133 = scmp.ne.s32.totalorder %s118, %s132
      %p134 = scmp.eq.s32.totalorder %s24, 0
      %p135 = por %p133, %p134
      %s136 = ssub.s32 %s18, %s25
      %p137 = scmp.eq.s32.totalorder %s136, 0
      %s139 = sadd.s32 %s138, 1
      %s140 = scalar_select %p137, %s138, %s139
      %p143 = pneg %p137
      %p144 = scmp.eq.s32.totalorder %s18, 1
      %p145 = por %p143, %p144
      %p146 = scmp.ne.s32.totalorder %s138, %s141
      %p147 = scmp.eq.s32.totalorder %s18, 0
      %p148 = por %p146, %p147
      %p149 = scmp.ne.s32.totalorder %s138, %s141
      %p150 = scmp.eq.s32.totalorder %s23, 1
      %p151 = por %p149, %p150
      %p152 = scmp.ne.s32.totalorder %s141, %s142
      %p153 = scmp.eq.s32.totalorder %s23, 0
      %p154 = por %p152, %p153
      %p155 = scmp.ne.s32.totalorder %s141, %s142
      %p156 = scmp.eq.s32.totalorder %s24, 1
      %p157 = por %p155, %p156
      %p159 = scmp.ne.s32.totalorder %s142, %s158
      %p160 = scmp.eq.s32.totalorder %s24, 0
      %p161 = por %p159, %p160
      %p162 = scmp.le.s32.totalorder 1, %s18
      %p163 = scmp.lt.s32.totalorder %s18, 3
      %p164 = pnand %p162, %p163
      %p165 = pneg %p164
      // Predicated region
      $region9: #{tpu_custom_call.1} parent=5 // pred_check
        _
      $region10: #{tpu_custom_call.1} parent=5 // pred_check_branch
        %167 = sbr.rel (%p164) target = $region12
      $region11: #{tpu_custom_call.1} parent=5 // pred_region
        %s168 = ssub.s32 %s18, 1
        // Predicated region
        $region13: #{tpu_custom_call.1} parent=11 // pred_check
          %p169 = pneg %p65
        $region14: #{tpu_custom_call.1} parent=11 // pred_check_branch
          %171 = sbr.rel (%p169) target = $region16
        $region15: #{tpu_custom_call.1} parent=11 // pred_region
          %s173 = ssub.s32 3072, 3072
          %174 = vsyncadd [#allocation7], %s173
          %s175 = sshll.u32 [#allocation6], 4
          %s176 = int_to_ptr.vmem [resolvable:$true] %s175
          %181 = dma.hbm_to_vmem [thread:$0]  %s1, 3072, %s176, [#allocation7], 64, 64, 4
        $region16: #{tpu_custom_call.1} parent=11 // pred_fallthru
          _
        // Predicated region
        $region17: #{tpu_custom_call.1} parent=11 // pred_check
          %p182 = pneg %p86
        $region18: #{tpu_custom_call.1} parent=11 // pred_check_branch
          %184 = sbr.rel (%p182) target = $region20
        $region19: #{tpu_custom_call.1} parent=11 // pred_region
          _
        $region20: #{tpu_custom_call.1} parent=11 // pred_fallthru
          _
        // Predicated region
        $region21: #{tpu_custom_call.1} parent=11 // pred_check
          %p185 = pneg %p107
        $region22: #{tpu_custom_call.1} parent=11 // pred_check_branch
          %187 = sbr.rel (%p185) target = $region24
        $region23: #{tpu_custom_call.1} parent=11 // pred_region
          %s189 = ssub.s32 3072, 3072
          %190 = vsyncadd [#allocation7], %s189
          %s191 = sshll.u32 [#allocation8], 4
          %s192 = int_to_ptr.vmem [resolvable:$true] %s191
          %197 = dma.hbm_to_vmem [thread:$0]  %s3, 3072, %s192, [#allocation7], 64, 64, 4
        $region24: #{tpu_custom_call.1} parent=11 // pred_fallthru
          _
        // Predicated region
        $region25: #{tpu_custom_call.1} parent=11 // pred_check
          %p198 = pneg %p128
        $region26: #{tpu_custom_call.1} parent=11 // pred_check_branch
          %200 = sbr.rel (%p198) target = $region28
        $region27: #{tpu_custom_call.1} parent=11 // pred_region
          _
        $region28: #{tpu_custom_call.1} parent=11 // pred_fallthru
          _
      $region12: #{tpu_custom_call.1} parent=5 // pred_fallthru
        _
      %p201 = scmp.lt.s32.totalorder %s18, 2
      // Predicated region
      $region29: #{tpu_custom_call.1} parent=5 // pred_check
        %p202 = pneg %p201
      $region30: #{tpu_custom_call.1} parent=5 // pred_check_branch
        %204 = sbr.rel (%p202) target = $region32
      $region31: #{tpu_custom_call.1} parent=5 // pred_region
        // Predicated region
        $region33: #{tpu_custom_call.1} parent=31 // pred_check
          %p205 = pneg %p38
        $region34: #{tpu_custom_call.1} parent=31 // pred_check_branch
          %207 = sbr.rel (%p205) target = $region36
        $region35: #{tpu_custom_call.1} parent=31 // pred_region
          %s208 = sand.u32 %s28, 1
          %s209 = scalar_lea.sflag [#allocation4], %s208
          %s210 = sand.u32 %s28, 1
          %s211 = smul.addr %s210, 24
          %s212 = scalar_lea.vmem [#allocation3], %s211
          %s214 = ssub.s32 384, 384
          %215 = vsyncadd %s209, %s214
          %s216 = smul.addr %s18, 3
          %s217 = smul.addr %s216, 128
          %s218 = scalar_lea.hbm %s0, %s217
          %s219 = sshll.u32 %s212, 4
          %s220 = int_to_ptr.vmem [resolvable:$true] %s219
          %225 = dma.hbm_to_vmem [thread:$0]  %s218, 384, %s220, %s209, 128, 128, 8
        $region36: #{tpu_custom_call.1} parent=31 // pred_fallthru
          _
      $region32: #{tpu_custom_call.1} parent=5 // pred_fallthru
        _
      %p226 = scmp.le.s32.totalorder 1, %s18
      %p227 = scmp.lt.s32.totalorder %s18, 3
      %p228 = pnand %p226, %p227
      %p229 = pneg %p228
      // Predicated region
      $region37: #{tpu_custom_call.1} parent=5 // pred_check
        _
      $region38: #{tpu_custom_call.1} parent=5 // pred_check_branch
        %231 = sbr.rel (%p228) target = $region40
      $region39: #{tpu_custom_call.1} parent=5 // pred_region
        %s232 = ssub.s32 %s18, 1
        %s233 = sand.u32 %s31, 1
        %s234 = scalar_lea.sflag [#allocation4], %s233
        %s235 = sand.u32 %s31, 1
        %s236 = smul.addr %s235, 24
        %s237 = scalar_lea.vmem [#allocation3], %s236
        // Predicated region
        $region41: #{tpu_custom_call.1} parent=39 // pred_check
          %p238 = pneg %p44
        $region42: #{tpu_custom_call.1} parent=39 // pred_check_branch
          %240 = sbr.rel (%p238) target = $region44
        $region43: #{tpu_custom_call.1} parent=39 // pred_region
          %241 = dma.done %s234, 384
        $region44: #{tpu_custom_call.1} parent=39 // pred_fallthru
          _
        // Predicated region
        $region45: #{tpu_custom_call.1} parent=39 // pred_check
          %p242 = pneg %p65
        $region46: #{tpu_custom_call.1} parent=39 // pred_check_branch
          %244 = sbr.rel (%p242) target = $region48
        $region47: #{tpu_custom_call.1} parent=39 // pred_region
          %245 = dma.done [#allocation7], 3072
        $region48: #{tpu_custom_call.1} parent=39 // pred_fallthru
          _
        // Predicated region
        $region49: #{tpu_custom_call.1} parent=39 // pred_check
          %p246 = pneg %p107
        $region50: #{tpu_custom_call.1} parent=39 // pred_check_branch
          %248 = sbr.rel (%p246) target = $region52
        $region51: #{tpu_custom_call.1} parent=39 // pred_region
          %249 = dma.done [#allocation7], 3072
        $region52: #{tpu_custom_call.1} parent=39 // pred_fallthru
          _
        %s250 = sand.u32 %s31, 1
        %s251 = scalar_lea.sflag [#allocation4], %s250
        %s252 = sand.u32 %s31, 1
        %s253 = smul.addr %s252, 24
        %s254 = scalar_lea.vmem [#allocation3], %s253
        %p255 = pneg %p44
        %p256 = pneg %p41
        %p257 = pneg %p65
        %p258 = pneg %p62
        %p259 = pneg %p86
        %p260 = pneg %p83
        %p261 = pneg %p107
        %p262 = pneg %p104
        %p263 = pneg %p128
        %p264 = pneg %p125
        %p265 = pneg %p154
        %p266 = pneg %p151
        %s267 = sand.u32 %s141, 1
        %s268 = scalar_lea.sflag [#allocation5], %s267
        %s269 = sand.u32 %s141, 1
        %s270 = smul.addr %s269, 16
        %s271 = scalar_lea.vmem [#allocation9], %s270
        %v273 = vld [vmem:[%s237] sm:$0xff]
        %v274 = vld [vmem:[%s237 + $0x8] sm:$0xff]
        %v275 = vpack.c.bf16 %v274, %v273
        %v276 = vld [vmem:[%s237 + $0x1] sm:$0xff]
        %v277 = vld [vmem:[%s237 + $0x9] sm:$0xff]
        %v278 = vpack.c.bf16 %v277, %v276
        %v279 = vld [vmem:[%s237 + $0x2] sm:$0xff]
        %v280 = vld [vmem:[%s237 + $0xa] sm:$0xff]
        %v281 = vpack.c.bf16 %v280, %v279
        %v282 = vld [vmem:[#allocation6] sm:$0xf]
        %v283 = vld [vmem:[#allocation6 + $0x4] sm:$0xf]
        %v284 = vld [vmem:[#allocation6 + $0x8] sm:$0xf]
        %v285 = vld [vmem:[#allocation6 + $0xc] sm:$0xf]
        %v286 = vld [vmem:[#allocation6 + $0x10] sm:$0xf]
        %v287 = vld [vmem:[#allocation6 + $0x14] sm:$0xf]
        %v288 = vld [vmem:[#allocation6 + $0x18] sm:$0xf]
        %v289 = vld [vmem:[#allocation6 + $0x1c] sm:$0xf]
        %v290 = vld [vmem:[#allocation6 + $0x20] sm:$0xf]
        %v291 = vld [vmem:[#allocation6 + $0x24] sm:$0xf]
        %v292 = vld [vmem:[#allocation6 + $0x28] sm:$0xf]
        %v293 = vld [vmem:[#allocation6 + $0x2c] sm:$0xf]
        %v294 = vld [vmem:[#allocation6 + $0x30] sm:$0xf]
        %v295 = vld [vmem:[#allocation6 + $0x34] sm:$0xf]
        %v296 = vld [vmem:[#allocation6 + $0x38] sm:$0xf]
        %v297 = vld [vmem:[#allocation6 + $0x3c] sm:$0xf]
        %v298 = vld [vmem:[#allocation6 + $0x40] sm:$0xf]
        %v299 = vld [vmem:[#allocation6 + $0x44] sm:$0xf]
        %v300 = vld [vmem:[#allocation6 + $0x48] sm:$0xf]
        %v301 = vld [vmem:[#allocation6 + $0x4c] sm:$0xf]
        %v302 = vld [vmem:[#allocation6 + $0x50] sm:$0xf]
        %v303 = vld [vmem:[#allocation6 + $0x54] sm:$0xf]
        %v304 = vld [vmem:[#allocation6 + $0x58] sm:$0xf]
        %v305 = vld [vmem:[#allocation6 + $0x5c] sm:$0xf]
        %v306 = vld [vmem:[#allocation6 + $0x60] sm:$0xf]
        %v307 = vld [vmem:[#allocation6 + $0x64] sm:$0xf]
        %v308 = vld [vmem:[#allocation6 + $0x68] sm:$0xf]
        %v309 = vld [vmem:[#allocation6 + $0x6c] sm:$0xf]
        %v310 = vld [vmem:[#allocation6 + $0x70] sm:$0xf]
        %v311 = vld [vmem:[#allocation6 + $0x74] sm:$0xf]
        %v312 = vld [vmem:[#allocation6 + $0x78] sm:$0xf]
        %v313 = vld [vmem:[#allocation6 + $0x7c] sm:$0xf]
        %v314 = vld [vmem:[#allocation6 + $0x80] sm:$0xf]
        %v315 = vld [vmem:[#allocation6 + $0x84] sm:$0xf]
        %v316 = vld [vmem:[#allocation6 + $0x88] sm:$0xf]
        %v317 = vld [vmem:[#allocation6 + $0x8c] sm:$0xf]
        %v318 = vld [vmem:[#allocation6 + $0x90] sm:$0xf]
        %v319 = vld [vmem:[#allocation6 + $0x94] sm:$0xf]
        %v320 = vld [vmem:[#allocation6 + $0x98] sm:$0xf]
        %v321 = vld [vmem:[#allocation6 + $0x9c] sm:$0xf]
        %v322 = vld [vmem:[#allocation6 + $0xa0] sm:$0xf]
        %v323 = vld [vmem:[#allocation6 + $0xa4] sm:$0xf]
        %v324 = vld [vmem:[#allocation6 + $0xa8] sm:$0xf]
        %v325 = vld [vmem:[#allocation6 + $0xac] sm:$0xf]
        %v326 = vld [vmem:[#allocation6 + $0xb0] sm:$0xf]
        %v327 = vld [vmem:[#allocation6 + $0xb4] sm:$0xf]
        %v328 = vld [vmem:[#allocation6 + $0xb8] sm:$0xf]
        %v329 = vld [vmem:[#allocation6 + $0xbc] sm:$0xf]
        %v330 = vld [vmem:[%s2] sm:$0x1]
        %v332 = vlaneseq
        %v333 = vshrl.u32 %v332, 7
        %v334 = vsub.s32 0, %v333
        %v335 = vrot.slane %v330, %v334
        %v385 = vunpack.c.l.b16 %v282
        %v386 = vunpack.c.l.b16 %v283
        %v387 = vunpack.c.l.b16 %v284
        %v388 = vunpack.c.l.b16 %v285
        %v389 = vunpack.c.l.b16 %v286
        %v390 = vunpack.c.l.b16 %v287
        %v391 = vunpack.c.l.b16 %v288
        %v392 = vunpack.c.l.b16 %v289
        %v393 = vunpack.c.l.b16 %v290
        %v394 = vunpack.c.l.b16 %v291
        %v395 = vunpack.c.l.b16 %v292
        %v396 = vunpack.c.l.b16 %v293
        %v397 = vunpack.c.l.b16 %v294
        %v398 = vunpack.c.l.b16 %v295
        %v399 = vunpack.c.l.b16 %v296
        %v400 = vunpack.c.l.b16 %v297
        %v401 = vunpack.c.l.b16 %v298
        %v402 = vunpack.c.l.b16 %v299
        %v403 = vunpack.c.l.b16 %v300
        %v404 = vunpack.c.l.b16 %v301
        %v405 = vunpack.c.l.b16 %v302
        %v406 = vunpack.c.l.b16 %v303
        %v407 = vunpack.c.l.b16 %v304
        %v408 = vunpack.c.l.b16 %v305
        %v409 = vunpack.c.l.b16 %v306
        %v410 = vunpack.c.l.b16 %v307
        %v411 = vunpack.c.l.b16 %v308
        %v412 = vunpack.c.l.b16 %v309
        %v413 = vunpack.c.l.b16 %v310
        %v414 = vunpack.c.l.b16 %v311
        %v415 = vunpack.c.l.b16 %v312
        %v416 = vunpack.c.l.b16 %v313
        %v417 = vunpack.c.l.b16 %v314
        %v418 = vunpack.c.l.b16 %v315
        %v419 = vunpack.c.l.b16 %v316
        %v420 = vunpack.c.l.b16 %v317
        %v421 = vunpack.c.l.b16 %v318
        %v422 = vunpack.c.l.b16 %v319
        %v423 = vunpack.c.l.b16 %v320
        %v424 = vunpack.c.l.b16 %v321
        %v425 = vunpack.c.l.b16 %v322
        %v426 = vunpack.c.l.b16 %v323
        %v427 = vunpack.c.l.b16 %v324
        %v428 = vunpack.c.l.b16 %v325
        %v429 = vunpack.c.l.b16 %v326
        %v430 = vunpack.c.l.b16 %v327
        %v431 = vunpack.c.l.b16 %v328
        %v432 = vunpack.c.l.b16 %v329
        %v433 = vpack.c.b16 %v386, %v385
        %v434 = vpack.c.b16 %v388, %v387
        %v435 = vpack.c.b16 %v390, %v389
        %v436 = vpack.c.b16 %v392, %v391
        %v437 = vpack.c.b16 %v394, %v393
        %v438 = vpack.c.b16 %v396, %v395
        %v439 = vpack.c.b16 %v398, %v397
        %v440 = vpack.c.b16 %v400, %v399
        %v441 = vpack.c.b16 %v402, %v401
        %v442 = vpack.c.b16 %v404, %v403
        %v443 = vpack.c.b16 %v406, %v405
        %v444 = vpack.c.b16 %v408, %v407
        %v445 = vpack.c.b16 %v410, %v409
        %v446 = vpack.c.b16 %v412, %v411
        %v447 = vpack.c.b16 %v414, %v413
        %v448 = vpack.c.b16 %v416, %v415
        %v449 = vpack.c.b16 %v418, %v417
        %v450 = vpack.c.b16 %v420, %v419
        %v451 = vpack.c.b16 %v422, %v421
        %v452 = vpack.c.b16 %v424, %v423
        %v453 = vpack.c.b16 %v426, %v425
        %v454 = vpack.c.b16 %v428, %v427
        %v455 = vpack.c.b16 %v430, %v429
        %v456 = vpack.c.b16 %v432, %v431
        %481 = vmatprep.subr.bf16.mxu0 0
        %482 = vmatpush1.bf16.msra.mxu0 %v433
        %483 = vmatprep.subr.bf16.mxu0 0
        %484 = vmatpush1.bf16.msra.mxu0 %v434
        %485 = vmatprep.subr.bf16.mxu0 0
        %486 = vmatpush1.bf16.msra.mxu0 %v435
        %487 = vmatprep.subr.bf16.mxu0 0
        %488 = vmatpush1.bf16.msra.mxu0 %v436
        %489 = vmatprep.subr.bf16.mxu0 0
        %490 = vmatpush1.bf16.msra.mxu0 %v437
        %491 = vmatprep.subr.bf16.mxu0 0
        %492 = vmatpush1.bf16.msra.mxu0 %v438
        %493 = vmatprep.subr.bf16.mxu0 0
        %494 = vmatpush1.bf16.msra.mxu0 %v439
        %495 = vmatprep.subr.bf16.mxu0 0
        %496 = vmatpush1.bf16.msra.mxu0 %v440
        %497 = vmatprep.subr.bf16.mxu0 0
        %498 = vmatpush1.bf16.msra.mxu0 %v441
        %499 = vmatprep.subr.bf16.mxu0 0
        %500 = vmatpush1.bf16.msra.mxu0 %v442
        %501 = vmatprep.subr.bf16.mxu0 0
        %502 = vmatpush1.bf16.msra.mxu0 %v443
        %503 = vmatprep.subr.bf16.mxu0 0
        %504 = vmatpush1.bf16.msra.mxu0 %v444
        %505 = vmatprep.subr.bf16.mxu0 0
        %506 = vmatpush1.bf16.msra.mxu0 %v445
        %507 = vmatprep.subr.bf16.mxu0 0
        %508 = vmatpush1.bf16.msra.mxu0 %v446
        %509 = vmatprep.subr.bf16.mxu0 0
        %510 = vmatpush1.bf16.msra.mxu0 %v447
        %511 = vmatprep.subr.bf16.mxu0 0
        %512 = vmatpush1.bf16.msra.mxu0 %v448
        %513 = vmatprep.mubr.bf16.mxu0 %v278
        %514 = vmatmul.mubr.bf16.gmra.mrb[0].mxu0 %v275
        %v515 = vpop.f32.mrb[0].mxu0
        %v516 = vadd.f32 %v335, %v515
        %v517 = vpop.f32.mrb[0].mxu0
        %v518 = vpop.f32.mrb[0].mxu0
        %v519 = vadd.f32 %v335, %v518
        %v520 = vpop.f32.mrb[0].mxu0
        %521 = vdwg.mxu0
        %522 = vmatprep.subr.bf16.mxu0 0
        %523 = vmatpush1.bf16.msra.mxu0 %v449
        %524 = vmatprep.subr.bf16.mxu0 0
        %525 = vmatpush1.bf16.msra.mxu0 %v450
        %526 = vmatprep.subr.bf16.mxu0 0
        %527 = vmatpush1.bf16.msra.mxu0 %v451
        %528 = vmatprep.subr.bf16.mxu0 0
        %529 = vmatpush1.bf16.msra.mxu0 %v452
        %530 = vmatprep.subr.bf16.mxu0 0
        %531 = vmatpush1.bf16.msra.mxu0 %v453
        %532 = vmatprep.subr.bf16.mxu0 0
        %533 = vmatpush1.bf16.msra.mxu0 %v454
        %534 = vmatprep.subr.bf16.mxu0 0
        %535 = vmatpush1.bf16.msra.mxu0 %v455
        %536 = vmatprep.subr.bf16.mxu0 0
        %537 = vmatpush1.bf16.msra.mxu0 %v456
        %538 = vmatprep.subr.bf16.mxu0 0
        %539 = vmatpush1.bf16.msra.mxu0 0
        %540 = vmatprep.subr.bf16.mxu0 0
        %541 = vmatpush1.bf16.msra.mxu0 0
        %542 = vmatprep.subr.bf16.mxu0 0
        %543 = vmatpush1.bf16.msra.mxu0 0
        %544 = vmatprep.subr.bf16.mxu0 0
        %545 = vmatpush1.bf16.msra.mxu0 0
        %546 = vmatprep.subr.bf16.mxu0 0
        %547 = vmatpush1.bf16.msra.mxu0 0
        %548 = vmatprep.subr.bf16.mxu0 0
        %549 = vmatpush1.bf16.msra.mxu0 0
        %550 = vmatprep.subr.bf16.mxu0 0
        %551 = vmatpush1.bf16.msra.mxu0 0
        %552 = vmatprep.subr.bf16.mxu0 0
        %553 = vmatpush1.bf16.msra.mxu0 0
        %554 = vmatprep.mubr.bf16.mxu0 0
        %555 = vmatmul.mubr.bf16.gmra.mrb[0].mxu0 %v281
        %v556 = vpop.f32.mrb[0].mxu0
        %v557 = vadd.f32 %v516, %v556
        %v558 = vpop.f32.mrb[0].mxu0
        %v559 = vpop.f32.mrb[0].mxu0
        %v560 = vadd.f32 %v519, %v559
        %v561 = vpop.f32.mrb[0].mxu0
        %562 = vdwg.mxu0
        %v563 = vmax.f32 %v557, 0.0
        %v564 = vmax.f32 %v560, 0.0
        %vm565 = vcmask 1040384
        %vm566 = vsmask.f32 256
        %vm567 = vmand %vm565, %vm566
        %v568 = vld [vmem:[#allocation2] sm:$0x1]
        %v569 = vsel %vm567, 0, %v568
        %570 = vst [vmem:[#allocation2] sm:$0x1] %v569
        %vm571 = vcmask 1043456
        %vm572 = vsmask.f32 7938
        %vm573 = vmand %vm571, %vm572
        %v574 = vld [vmem:[#allocation2 + $0x8] sm:$0xf]
        %v575 = vsel %vm573, 0, %v574
        %576 = vst [vmem:[#allocation2 + $0x8] sm:$0xf] %v575
        %v577 = vpack.c.bf16 %v564, %v563
        %v579 = vunpack.c.l.b16 %v577
        %v580 = vunpack.c.h.b16 %v577
        %v581 = vpack.c.b16 %v579, %v579
        %v582 = vpack.c.b16 %v580, %v580
        %vm583 = vsmask.f32 4368
        %vm584 = vmor %vm566, %vm583
        %v586 = vshrl.u32 %v581, 16
        %v588 = vrot.slane %v586, 7
        %v589 = vshll.u32 %v581, 16
        %v591 = vor.u32 %v588, %v589
        %v592 = vrot.slane %v588, 4
        %v594 = vshrl.u32 %v582, 16
        %v596 = vrot.slane %v594, 7
        %v597 = vshll.u32 %v582, 16
        %v599 = vor.u32 %v596, %v597
        %v600 = vsel %vm584, %v592, %v599
        %v601 = vrot.slane %v596, 4
        %v605 = vld [vmem:[#allocation2] sm:$0xf]
        %v606 = vsel %vm573, %v591, %v605
        %607 = vst [vmem:[#allocation2] sm:$0xf] %v606
        %608 = vst [vmem:[#allocation2 + $0x4] sm:$0xf] %v600
        %v609 = vld [vmem:[#allocation2 + $0x8] sm:$0x1]
        %v610 = vsel %vm567, %v601, %v609
        %611 = vst [vmem:[#allocation2 + $0x8] sm:$0x1] %v610
        %v612 = vld [vmem:[#allocation2] sm:$0xf]
        %v613 = vld [vmem:[#allocation2 + $0x4] sm:$0xf]
        %v614 = vld [vmem:[#allocation2] sm:$0xf]
        %v615 = vld [vmem:[#allocation2 + $0x4] sm:$0xf]
        %v616 = vld [vmem:[#allocation2 + $0x8] sm:$0x1]
        %v617 = vld [vmem:[#allocation2] sm:$0xe]
        %v620 = vunpack.c.l.b16 %v612
        %v621 = vunpack.c.l.b16 %v613
        %v622 = vpack.c.b16 %v621, %v620
        %v627 = vunpack.c.l.b16 %v614
        %v628 = vunpack.c.l.b16 %v615
        %v629 = vunpack.c.l.b16 %v616
        %v630 = vpack.c.b16 %v628, %v627
        %v631 = vpack.c.b16 %v629, %v629
        %vm632 = vsmask.f32 7424
        %v634 = vshrl.u32 %v630, 16
        %v636 = vshll.u32 %v630, 16
        %v638 = vrot.slane %v636, 1
        %v639 = vor.u32 %v634, %v638
        %v641 = vshll.u32 %v631, 16
        %v643 = vrot.slane %v641, 1
        %v644 = vsel %vm632, %v639, %v643
        %v647 = vunpack.c.l.b16 %v617
        %v648 = vpack.c.b16 %v628, %v647
        %vm649 = vcmask 1046528
        %v650 = vrot.slane %v648, 1
        %v651 = vrot.slane %v631, 1
        %v652 = vsel %vm649, %v650, %v651
        %v654 = vld [vmem:[#allocation8] sm:$0xf]
        %v655 = vld [vmem:[#allocation8 + $0x4] sm:$0xf]
        %v656 = vld [vmem:[#allocation8 + $0x8] sm:$0xf]
        %v657 = vld [vmem:[#allocation8 + $0xc] sm:$0xf]
        %v658 = vld [vmem:[#allocation8 + $0x10] sm:$0xf]
        %v659 = vld [vmem:[#allocation8 + $0x14] sm:$0xf]
        %v660 = vld [vmem:[#allocation8 + $0x18] sm:$0xf]
        %v661 = vld [vmem:[#allocation8 + $0x1c] sm:$0xf]
        %v662 = vld [vmem:[#allocation8 + $0x20] sm:$0xf]
        %v663 = vld [vmem:[#allocation8 + $0x24] sm:$0xf]
        %v664 = vld [vmem:[#allocation8 + $0x28] sm:$0xf]
        %v665 = vld [vmem:[#allocation8 + $0x2c] sm:$0xf]
        %v666 = vld [vmem:[#allocation8 + $0x30] sm:$0xf]
        %v667 = vld [vmem:[#allocation8 + $0x34] sm:$0xf]
        %v668 = vld [vmem:[#allocation8 + $0x38] sm:$0xf]
        %v669 = vld [vmem:[#allocation8 + $0x3c] sm:$0xf]
        %v670 = vld [vmem:[#allocation8 + $0x40] sm:$0xf]
        %v671 = vld [vmem:[#allocation8 + $0x44] sm:$0xf]
        %v672 = vld [vmem:[#allocation8 + $0x48] sm:$0xf]
        %v673 = vld [vmem:[#allocation8 + $0x4c] sm:$0xf]
        %v674 = vld [vmem:[#allocation8 + $0x50] sm:$0xf]
        %v675 = vld [vmem:[#allocation8 + $0x54] sm:$0xf]
        %v676 = vld [vmem:[#allocation8 + $0x58] sm:$0xf]
        %v677 = vld [vmem:[#allocation8 + $0x5c] sm:$0xf]
        %v678 = vld [vmem:[#allocation8 + $0x60] sm:$0xf]
        %v679 = vld [vmem:[#allocation8 + $0x64] sm:$0xf]
        %v680 = vld [vmem:[#allocation8 + $0x68] sm:$0xf]
        %v681 = vld [vmem:[#allocation8 + $0x6c] sm:$0xf]
        %v682 = vld [vmem:[#allocation8 + $0x70] sm:$0xf]
        %v683 = vld [vmem:[#allocation8 + $0x74] sm:$0xf]
        %v684 = vld [vmem:[#allocation8 + $0x78] sm:$0xf]
        %v685 = vld [vmem:[#allocation8 + $0x7c] sm:$0xf]
        %v686 = vld [vmem:[#allocation8 + $0x80] sm:$0xf]
        %v687 = vld [vmem:[#allocation8 + $0x84] sm:$0xf]
        %v688 = vld [vmem:[#allocation8 + $0x88] sm:$0xf]
        %v689 = vld [vmem:[#allocation8 + $0x8c] sm:$0xf]
        %v690 = vld [vmem:[#allocation8 + $0x90] sm:$0xf]
        %v691 = vld [vmem:[#allocation8 + $0x94] sm:$0xf]
        %v692 = vld [vmem:[#allocation8 + $0x98] sm:$0xf]
        %v693 = vld [vmem:[#allocation8 + $0x9c] sm:$0xf]
        %v694 = vld [vmem:[#allocation8 + $0xa0] sm:$0xf]
        %v695 = vld [vmem:[#allocation8 + $0xa4] sm:$0xf]
        %v696 = vld [vmem:[#allocation8 + $0xa8] sm:$0xf]
        %v697 = vld [vmem:[#allocation8 + $0xac] sm:$0xf]
        %v698 = vld [vmem:[#allocation8 + $0xb0] sm:$0xf]
        %v699 = vld [vmem:[#allocation8 + $0xb4] sm:$0xf]
        %v700 = vld [vmem:[#allocation8 + $0xb8] sm:$0xf]
        %v701 = vld [vmem:[#allocation8 + $0xbc] sm:$0xf]
        %v702 = vld [vmem:[%s4] sm:$0x1]
        %v704 = vlaneseq
        %v705 = vshrl.u32 %v704, 7
        %v706 = vsub.s32 0, %v705
        %v707 = vrot.slane %v702, %v706
        %v757 = vunpack.c.l.b16 %v654
        %v758 = vunpack.c.l.b16 %v655
        %v759 = vunpack.c.l.b16 %v656
        %v760 = vunpack.c.l.b16 %v657
        %v761 = vunpack.c.l.b16 %v658
        %v762 = vunpack.c.l.b16 %v659
        %v763 = vunpack.c.l.b16 %v660
        %v764 = vunpack.c.l.b16 %v661
        %v765 = vunpack.c.l.b16 %v662
        %v766 = vunpack.c.l.b16 %v663
        %v767 = vunpack.c.l.b16 %v664
        %v768 = vunpack.c.l.b16 %v665
        %v769 = vunpack.c.l.b16 %v666
        %v770 = vunpack.c.l.b16 %v667
        %v771 = vunpack.c.l.b16 %v668
        %v772 = vunpack.c.l.b16 %v669
        %v773 = vunpack.c.l.b16 %v670
        %v774 = vunpack.c.l.b16 %v671
        %v775 = vunpack.c.l.b16 %v672
        %v776 = vunpack.c.l.b16 %v673
        %v777 = vunpack.c.l.b16 %v674
        %v778 = vunpack.c.l.b16 %v675
        %v779 = vunpack.c.l.b16 %v676
        %v780 = vunpack.c.l.b16 %v677
        %v781 = vunpack.c.l.b16 %v678
        %v782 = vunpack.c.l.b16 %v679
        %v783 = vunpack.c.l.b16 %v680
        %v784 = vunpack.c.l.b16 %v681
        %v785 = vunpack.c.l.b16 %v682
        %v786 = vunpack.c.l.b16 %v683
        %v787 = vunpack.c.l.b16 %v684
        %v788 = vunpack.c.l.b16 %v685
        %v789 = vunpack.c.l.b16 %v686
        %v790 = vunpack.c.l.b16 %v687
        %v791 = vunpack.c.l.b16 %v688
        %v792 = vunpack.c.l.b16 %v689
        %v793 = vunpack.c.l.b16 %v690
        %v794 = vunpack.c.l.b16 %v691
        %v795 = vunpack.c.l.b16 %v692
        %v796 = vunpack.c.l.b16 %v693
        %v797 = vunpack.c.l.b16 %v694
        %v798 = vunpack.c.l.b16 %v695
        %v799 = vunpack.c.l.b16 %v696
        %v800 = vunpack.c.l.b16 %v697
        %v801 = vunpack.c.l.b16 %v698
        %v802 = vunpack.c.l.b16 %v699
        %v803 = vunpack.c.l.b16 %v700
        %v804 = vunpack.c.l.b16 %v701
        %v805 = vpack.c.b16 %v758, %v757
        %v806 = vpack.c.b16 %v760, %v759
        %v807 = vpack.c.b16 %v762, %v761
        %v808 = vpack.c.b16 %v764, %v763
        %v809 = vpack.c.b16 %v766, %v765
        %v810 = vpack.c.b16 %v768, %v767
        %v811 = vpack.c.b16 %v770, %v769
        %v812 = vpack.c.b16 %v772, %v771
        %v813 = vpack.c.b16 %v774, %v773
        %v814 = vpack.c.b16 %v776, %v775
        %v815 = vpack.c.b16 %v778, %v777
        %v816 = vpack.c.b16 %v780, %v779
        %v817 = vpack.c.b16 %v782, %v781
        %v818 = vpack.c.b16 %v784, %v783
        %v819 = vpack.c.b16 %v786, %v785
        %v820 = vpack.c.b16 %v788, %v787
        %v821 = vpack.c.b16 %v790, %v789
        %v822 = vpack.c.b16 %v792, %v791
        %v823 = vpack.c.b16 %v794, %v793
        %v824 = vpack.c.b16 %v796, %v795
        %v825 = vpack.c.b16 %v798, %v797
        %v826 = vpack.c.b16 %v800, %v799
        %v827 = vpack.c.b16 %v802, %v801
        %v828 = vpack.c.b16 %v804, %v803
        %853 = vmatprep.subr.bf16.mxu0 0
        %854 = vmatpush1.bf16.msra.mxu0 %v805
        %855 = vmatprep.subr.bf16.mxu0 0
        %856 = vmatpush1.bf16.msra.mxu0 %v806
        %857 = vmatprep.subr.bf16.mxu0 0
        %858 = vmatpush1.bf16.msra.mxu0 %v807
        %859 = vmatprep.subr.bf16.mxu0 0
        %860 = vmatpush1.bf16.msra.mxu0 %v808
        %861 = vmatprep.subr.bf16.mxu0 0
        %862 = vmatpush1.bf16.msra.mxu0 %v809
        %863 = vmatprep.subr.bf16.mxu0 0
        %864 = vmatpush1.bf16.msra.mxu0 %v810
        %865 = vmatprep.subr.bf16.mxu0 0
        %866 = vmatpush1.bf16.msra.mxu0 %v811
        %867 = vmatprep.subr.bf16.mxu0 0
        %868 = vmatpush1.bf16.msra.mxu0 %v812
        %869 = vmatprep.subr.bf16.mxu0 0
        %870 = vmatpush1.bf16.msra.mxu0 %v813
        %871 = vmatprep.subr.bf16.mxu0 0
        %872 = vmatpush1.bf16.msra.mxu0 %v814
        %873 = vmatprep.subr.bf16.mxu0 0
        %874 = vmatpush1.bf16.msra.mxu0 %v815
        %875 = vmatprep.subr.bf16.mxu0 0
        %876 = vmatpush1.bf16.msra.mxu0 %v816
        %877 = vmatprep.subr.bf16.mxu0 0
        %878 = vmatpush1.bf16.msra.mxu0 %v817
        %879 = vmatprep.subr.bf16.mxu0 0
        %880 = vmatpush1.bf16.msra.mxu0 %v818
        %881 = vmatprep.subr.bf16.mxu0 0
        %882 = vmatpush1.bf16.msra.mxu0 %v819
        %883 = vmatprep.subr.bf16.mxu0 0
        %884 = vmatpush1.bf16.msra.mxu0 %v820
        %885 = vmatprep.mubr.bf16.mxu0 %v644
        %886 = vmatmul.mubr.bf16.gmra.mrb[0].mxu0 %v622
        %v887 = vpop.f32.mrb[0].mxu0
        %v888 = vadd.f32 %v707, %v887
        %v889 = vpop.f32.mrb[0].mxu0
        %v890 = vpop.f32.mrb[0].mxu0
        %v891 = vadd.f32 %v707, %v890
        %v892 = vpop.f32.mrb[0].mxu0
        %893 = vdwg.mxu0
        %894 = vmatprep.subr.bf16.mxu0 0
        %895 = vmatpush1.bf16.msra.mxu0 %v821
        %896 = vmatprep.subr.bf16.mxu0 0
        %897 = vmatpush1.bf16.msra.mxu0 %v822
        %898 = vmatprep.subr.bf16.mxu0 0
        %899 = vmatpush1.bf16.msra.mxu0 %v823
        %900 = vmatprep.subr.bf16.mxu0 0
        %901 = vmatpush1.bf16.msra.mxu0 %v824
        %902 = vmatprep.subr.bf16.mxu0 0
        %903 = vmatpush1.bf16.msra.mxu0 %v825
        %904 = vmatprep.subr.bf16.mxu0 0
        %905 = vmatpush1.bf16.msra.mxu0 %v826
        %906 = vmatprep.subr.bf16.mxu0 0
        %907 = vmatpush1.bf16.msra.mxu0 %v827
        %908 = vmatprep.subr.bf16.mxu0 0
        %909 = vmatpush1.bf16.msra.mxu0 %v828
        %910 = vmatprep.subr.bf16.mxu0 0
        %911 = vmatpush1.bf16.msra.mxu0 0
        %912 = vmatprep.subr.bf16.mxu0 0
        %913 = vmatpush1.bf16.msra.mxu0 0
        %914 = vmatprep.subr.bf16.mxu0 0
        %915 = vmatpush1.bf16.msra.mxu0 0
        %916 = vmatprep.subr.bf16.mxu0 0
        %917 = vmatpush1.bf16.msra.mxu0 0
        %918 = vmatprep.subr.bf16.mxu0 0
        %919 = vmatpush1.bf16.msra.mxu0 0
        %920 = vmatprep.subr.bf16.mxu0 0
        %921 = vmatpush1.bf16.msra.mxu0 0
        %922 = vmatprep.subr.bf16.mxu0 0
        %923 = vmatpush1.bf16.msra.mxu0 0
        %924 = vmatprep.subr.bf16.mxu0 0
        %925 = vmatpush1.bf16.msra.mxu0 0
        %926 = vmatprep.mubr.bf16.mxu0 0
        %927 = vmatmul.mubr.bf16.gmra.mrb[0].mxu0 %v652
        %v928 = vpop.f32.mrb[0].mxu0
        %v929 = vadd.f32 %v888, %v928
        %v930 = vpop.f32.mrb[0].mxu0
        %v931 = vpop.f32.mrb[0].mxu0
        %v932 = vadd.f32 %v891, %v931
        %v933 = vpop.f32.mrb[0].mxu0
        %934 = vdwg.mxu0
        %v935 = vld [vmem:[%s237 + $0x1] sm:$0xff]
        %v936 = vld [vmem:[%s237 + $0x9] sm:$0xff]
        %v937 = vadd.f32 %v929, %v935
        %v938 = vadd.f32 %v932, %v936
        %v939 = vmax.f32 %v937, 0.0
        %v940 = vmax.f32 %v938, 0.0
        %941 = vst [vmem:[%s271] sm:$0xff] %v939
        %942 = vst [vmem:[%s271 + $0x8] sm:$0xff] %v940
        %s943 = sand.u32 %s141, 1
        %s944 = scalar_lea.sflag [#allocation5], %s943
        %s945 = sand.u32 %s141, 1
        %s946 = smul.addr %s945, 16
        %s947 = scalar_lea.vmem [#allocation9], %s946
        // Predicated region
        $region53: #{tpu_custom_call.1} parent=39 // pred_check
          %p948 = pneg %p151
        $region54: #{tpu_custom_call.1} parent=39 // pred_check_branch
          %950 = sbr.rel (%p948) target = $region56
        $region55: #{tpu_custom_call.1} parent=39 // pred_region
          %s952 = ssub.s32 256, 256
          %953 = vsyncadd %s944, %s952
          %s954 = smul.addr %s23, 2
          %s955 = smul.addr %s954, 128
          %s956 = scalar_lea.hbm %s5, %s955
          %s957 = sshll.u32 %s947, 4
          %s958 = int_to_ptr.vmem [resolvable:$true] %s957
          %963 = dma.vmem_to_hbm [thread:$0]  %s958, 256, %s956, %s944, 128, 128, 8
        $region56: #{tpu_custom_call.1} parent=39 // pred_fallthru
          _
      $region40: #{tpu_custom_call.1} parent=5 // pred_fallthru
        _
      %p964 = scmp.le.s32.totalorder 2, %s18
      // Predicated region
      $region57: #{tpu_custom_call.1} parent=5 // pred_check
        %p965 = pneg %p964
      $region58: #{tpu_custom_call.1} parent=5 // pred_check_branch
        %967 = sbr.rel (%p965) target = $region60
      $region59: #{tpu_custom_call.1} parent=5 // pred_region
        %s968 = ssub.s32 %s18, 2
        // Predicated region
        $region61: #{tpu_custom_call.1} parent=59 // pred_check
          %p969 = pneg %p157
        $region62: #{tpu_custom_call.1} parent=59 // pred_check_branch
          %971 = sbr.rel (%p969) target = $region64
        $region63: #{tpu_custom_call.1} parent=59 // pred_region
          %s972 = sand.u32 %s142, 1
          %s973 = scalar_lea.sflag [#allocation5], %s972
          %s974 = sand.u32 %s142, 1
          %s975 = smul.addr %s974, 16
          %s976 = scalar_lea.vmem [#allocation9], %s975
          %977 = dma.done %s973, 256
        $region64: #{tpu_custom_call.1} parent=59 // pred_fallthru
          _
      $region60: #{tpu_custom_call.1} parent=5 // pred_fallthru
        _
    $region6: #{tpu_custom_call.1} parent=1 // loop_footer
      %s22 = sadd.s32 1, %s18
    $region7: #{tpu_custom_call.1} parent=1 // loop_footer_branch
      %17 = sbr.rel target = $region3
    $region8: #{tpu_custom_call.1} parent=1 // loop_exit
      _
    %978 = vsyncpa [#allocation4], 1
    %s979 = scalar_lea.sflag [#allocation4], 1
    %980 = vsyncpa %s979, 1
    %981 = vsyncpa [#allocation7], 1
    %982 = vsyncpa [#allocation5], 1
    %s983 = scalar_lea.sflag [#allocation5], 1
    %984 = vsyncpa %s983, 1

</llo_original>
